<compile_context>
chip_gen: v7x
topology: tpu7x:2x2x1
jax: 0.10.0
libtpu: 0.0.40
codegen_flags: <defaults>
</compile_context>

<pallas_src>
import functools

import jax
import jax.numpy as jnp
from jax.experimental import pallas as pl
from jax.experimental.pallas import tpu as pltpu


def _spectral_attention_kernel(x_ref, wf_ref, bf_ref, o_ref, *, G, D):
    """One batch tile per grid step.

    x_ref:  (TB, G*D)  input tile, flattened over (degree, features)
    wf_ref: (G*D, G)   fused (trans o layer) weight
    bf_ref: (1, G)     fused bias
    o_ref:  (TB, D)    output tile
    """
    xf = x_ref[...]                                    # (TB, G*D), native dtype
    xf32 = xf.astype(jnp.float32)

    # dropout (identity in eval) -> ReLU -> fused trans∘layer as one MXU matmul
    h = jnp.maximum(xf, 0)                             # (TB, G*D)
    logits = jnp.dot(h, wf_ref[...],
                     preferred_element_type=jnp.float32)          # (TB, G)
    logits = logits + bf_ref[...]

    # softmax over the degree axis (dim=1), exact divide for torch parity
    m = jnp.max(logits, axis=1, keepdims=True)         # (TB, 1)
    e = jnp.exp(logits - m)                            # (TB, G)
    attn = e / jnp.sum(e, axis=1, keepdims=True)       # (TB, G)

    # attn.unsqueeze(1).bmm(x): out[b, d] = sum_g attn[b, g] * x[b, g, d]
    # Broadcast columns hoisted, then a statically-unrolled accumulation.
    a = [attn[:, g:g + 1] for g in range(G)]           # G x (TB, 1)
    out = a[0] * xf32[:, 0:D]                          # (TB, D)
    for g in range(1, G):
        out = out + a[g] * xf32[:, g * D:(g + 1) * D]

    o_ref[...] = out.astype(o_ref.dtype)


def prepare_spectral_attention_weights(wt, bt, wl, *, param_dtype=jnp.float32):
    """Fold trans (Linear(D, D)) and layer (Linear(G*D, G, no bias)) into one matmul.

    wt: (D, D) spectral-normed trans weight; bt: (D,) trans bias;
    wl: (G, G*D) spectral-normed layer weight.
    Returns (W_fused (G*D, G), b_fused (1, G)).  Compute ONCE and reuse.
    """
    D = wt.shape[0]
    G = wl.shape[0]
    wl3 = wl.reshape(G, G, D)                                   # wl3[k, g, j]
    w_fused = jnp.einsum("ji,kgj->gik", wt, wl3).reshape(G * D, G)
    b_fused = jnp.einsum("j,kgj->k", bt, wl3).reshape(1, G)
    return w_fused.astype(param_dtype), b_fused.astype(jnp.float32)


def spectral_attention_forward(x, w_fused, b_fused, *, block_b=512):
    """x: (B, G, D); w_fused: (G*D, G); b_fused: (1, G). Returns (B, D)."""
    B, G, D = x.shape
    GD = G * D

    # Batch tile: multiple of 8 sublanes; capped so the double-buffered x tile
    # stays well under 1 MiB of VMEM on every TPU generation.
    TB = min(block_b, max(8, ((B + 7) // 8) * 8))
    n_blocks = pl.cdiv(B, TB)
    B_pad = n_blocks * TB

    x_flat = x.reshape(B, GD)
    if B_pad != B:
        x_flat = jnp.pad(x_flat, ((0, B_pad - B), (0, 0)))

    kernel = functools.partial(_spectral_attention_kernel, G=G, D=D)

    out = pl.pallas_call(
        kernel,
        out_shape=jax.ShapeDtypeStruct((B_pad, D), x.dtype),
        grid=(n_blocks,),
        in_specs=[
            # x streams through VMEM (double-buffered by default).  If xprof
            # ever shows exposed DMA, add pipeline_mode=pl.Buffered(3) here.
            pl.BlockSpec((TB, GD), lambda i: (i, 0)),
            # fused weight + bias stay resident (same block every grid step)
            pl.BlockSpec((GD, G), lambda i: (0, 0)),
            pl.BlockSpec((1, G), lambda i: (0, 0)),
        ],
        out_specs=pl.BlockSpec((TB, D), lambda i: (i, 0)),
        compiler_params=pltpu.CompilerParams(
            dimension_semantics=("parallel",)),  # shards across v7x's 2 TCs
    )(x_flat, w_fused, b_fused)

    return out[:B]


def _spectral_normalize(w, n_iter=50):
    """Divide w by its top singular value (what nn.utils.spectral_norm does,
    estimated here with a converged power iteration instead of 1 step)."""
    key = jax.random.PRNGKey(42)
    u = jax.random.normal(key, (w.shape[0],), dtype=w.dtype)
    u = u / (jnp.linalg.norm(u) + 1e-12)
    v = None
    for _ in range(n_iter):
        v = w.T @ u
        v = v / (jnp.linalg.norm(v) + 1e-12)
        u = w @ v
        u = u / (jnp.linalg.norm(u) + 1e-12)
    sigma = u @ (w @ v)
    return w / sigma


def _xavier_uniform(key, shape):
    fan_out, fan_in = shape
    bound = (6.0 / (fan_in + fan_out)) ** 0.5
    return jax.random.uniform(key, shape, minval=-bound, maxval=bound,
                              dtype=jnp.float32)


if __name__ == "__main__":
    B, G, D = 8, 4, 32   # batch, degree, input_dims  (G*D = 128, lane-dense)

    key = jax.random.PRNGKey(0)
    kx, kt, kl = jax.random.split(key, 3)

    x = jax.random.normal(kx, (B, G, D), dtype=jnp.float32)

    # trans = spectral_norm(Linear(D, D, bias=True)): xavier weight, zero bias
    wt = _spectral_normalize(_xavier_uniform(kt, (D, D)))
    bt = jnp.zeros((D,), dtype=jnp.float32)
    # layer = spectral_norm(Linear(G*D, G, bias=False)): xavier weight
    wl = _spectral_normalize(_xavier_uniform(kl, (G, G * D)))

    # Host-side weight fusion, done once (cache and reuse across forward calls).
    w_fused, b_fused = prepare_spectral_attention_weights(wt, bt, wl)

    out = spectral_attention_forward(x, w_fused, b_fused)
    out = jax.block_until_ready(out)
    assert out.shape == (B, D) and out.dtype == jnp.float32

    # Pure-JAX reference of the UNFUSED module math (also validates the fusion).
    h_ref = jnp.maximum(x, 0.0) @ wt.T + bt                # (B, G, D)
    logits_ref = h_ref.reshape(B, G * D) @ wl.T            # (B, G)
    attn_ref = jax.nn.softmax(logits_ref, axis=1)          # (B, G)
    out_ref = jnp.einsum("bg,bgd->bd", attn_ref, x)        # (B, D)
    max_err = float(jnp.max(jnp.abs(out - out_ref)))
    assert max_err < 2e-2, f"max abs error {max_err}"

    print("KERNEL_OK")
</pallas_src>

<mosaic_0001>
module attributes {stable_mosaic.version = 11 : i64} {
  func.func @_spectral_attention_kernel(%arg0: i32, %arg1: memref<8x128xf32, #tpu.memory_space<vmem>>, %arg2: memref<128x4xf32, #tpu.memory_space<vmem>>, %arg3: memref<1x4xf32, #tpu.memory_space<vmem>>, %arg4: memref<8x32xf32, #tpu.memory_space<vmem>>) attributes {dimension_semantics = [#tpu.dimension_semantics<parallel>], iteration_bounds = array<i64: 1>, scalar_prefetch = 0 : i64, scratch_operands = 0 : i64, tpu.core_type = #tpu.core_type<tc>, window_params = [{transform_indices = @transform_0, window_bounds = array<i64: 8, 128>}, {pipeline_mode = #tpu.pipeline_mode<synchronous>, transform_indices = @transform_1, window_bounds = array<i64: 128, 4>}, {pipeline_mode = #tpu.pipeline_mode<synchronous>, transform_indices = @transform_2, window_bounds = array<i64: 1, 4>}, {transform_indices = @transform_3, window_bounds = array<i64: 8, 32>}]} {
    %c0 = arith.constant 0 : index
    %c0_0 = arith.constant 0 : index
    %0 = vector.load %arg1[%c0, %c0_0] : memref<8x128xf32, #tpu.memory_space<vmem>>, vector<8x128xf32>
    %cst = arith.constant 0.000000e+00 : f32
    %1 = vector.broadcast %cst : f32 to vector<8x128xf32>
    %2 = arith.maximumf %0, %1 : vector<8x128xf32>
    %c0_1 = arith.constant 0 : index
    %c0_2 = arith.constant 0 : index
    %3 = vector.load %arg2[%c0_1, %c0_2] : memref<128x4xf32, #tpu.memory_space<vmem>>, vector<128x4xf32>
    %cst_3 = arith.constant dense<0.000000e+00> : vector<8x4xf32>
    %4 = tpu.matmul %2, %3, %cst_3 {dimension_numbers = #tpu.dot_dimension_numbers<[1], [0], [0], [1], [0, 0, 1, 1], [], []>} : vector<8x128xf32>, vector<128x4xf32>, vector<8x4xf32> -> vector<8x4xf32>
    %c0_4 = arith.constant 0 : index
    %c0_5 = arith.constant 0 : index
    %5 = vector.load %arg3[%c0_4, %c0_5] : memref<1x4xf32, #tpu.memory_space<vmem>>, vector<1x4xf32>
    %6 = vector.broadcast %5 : vector<1x4xf32> to vector<8x4xf32>
    %7 = arith.addf %4, %6 : vector<8x4xf32>
    %cst_6 = arith.constant dense<0xFF800000> : vector<8xf32>
    %8 = vector.multi_reduction <maximumf>, %7, %cst_6 [1] : vector<8x4xf32> to vector<8xf32>
    %9 = vector.shape_cast %8 : vector<8xf32> to vector<8x1xf32>
    %10 = vector.broadcast %9 : vector<8x1xf32> to vector<8x4xf32>
    %11 = arith.subf %7, %10 : vector<8x4xf32>
    %12 = math.exp %11 : vector<8x4xf32>
    %cst_7 = arith.constant dense<0.000000e+00> : vector<8xf32>
    %13 = vector.multi_reduction <add>, %12, %cst_7 [1] : vector<8x4xf32> to vector<8xf32>
    %14 = vector.shape_cast %13 : vector<8xf32> to vector<8x1xf32>
    %15 = vector.broadcast %14 : vector<8x1xf32> to vector<8x4xf32>
    %16 = arith.divf %12, %15 : vector<8x4xf32>
    %17 = vector.extract_strided_slice %16 {offsets = [0, 0], sizes = [8, 1], strides = [1, 1]} : vector<8x4xf32> to vector<8x1xf32>
    %18 = vector.extract_strided_slice %16 {offsets = [0, 1], sizes = [8, 1], strides = [1, 1]} : vector<8x4xf32> to vector<8x1xf32>
    %19 = vector.extract_strided_slice %16 {offsets = [0, 2], sizes = [8, 1], strides = [1, 1]} : vector<8x4xf32> to vector<8x1xf32>
    %20 = vector.extract_strided_slice %16 {offsets = [0, 3], sizes = [8, 1], strides = [1, 1]} : vector<8x4xf32> to vector<8x1xf32>
    %21 = vector.extract_strided_slice %0 {offsets = [0, 0], sizes = [8, 32], strides = [1, 1]} : vector<8x128xf32> to vector<8x32xf32>
    %22 = vector.broadcast %17 : vector<8x1xf32> to vector<8x32xf32>
    %23 = arith.mulf %22, %21 : vector<8x32xf32>
    %24 = vector.extract_strided_slice %0 {offsets = [0, 32], sizes = [8, 32], strides = [1, 1]} : vector<8x128xf32> to vector<8x32xf32>
    %25 = vector.broadcast %18 : vector<8x1xf32> to vector<8x32xf32>
    %26 = arith.mulf %25, %24 : vector<8x32xf32>
    %27 = arith.addf %23, %26 : vector<8x32xf32>
    %28 = vector.extract_strided_slice %0 {offsets = [0, 64], sizes = [8, 32], strides = [1, 1]} : vector<8x128xf32> to vector<8x32xf32>
    %29 = vector.broadcast %19 : vector<8x1xf32> to vector<8x32xf32>
    %30 = arith.mulf %29, %28 : vector<8x32xf32>
    %31 = arith.addf %27, %30 : vector<8x32xf32>
    %32 = vector.extract_strided_slice %0 {offsets = [0, 96], sizes = [8, 32], strides = [1, 1]} : vector<8x128xf32> to vector<8x32xf32>
    %33 = vector.broadcast %20 : vector<8x1xf32> to vector<8x32xf32>
    %34 = arith.mulf %33, %32 : vector<8x32xf32>
    %35 = arith.addf %31, %34 : vector<8x32xf32>
    %c0_8 = arith.constant 0 : index
    %c0_9 = arith.constant 0 : index
    %36 = vector.load %arg4[%c0_8, %c0_9] : memref<8x32xf32, #tpu.memory_space<vmem>>, vector<8x32xf32>
    tpu.vector_store %arg4[%c0_8, %c0_9], %35 {strides = array<i32>} : memref<8x32xf32, #tpu.memory_space<vmem>>, vector<8x32xf32>,
    return
  }
  func.func @transform_0(%arg0: i32) -> (i32, i32) {
    %c0_i32 = arith.constant 0 : i32
    %c0_i32_0 = arith.constant 0 : i32
    return %arg0, %c0_i32 : i32, i32
  }
  func.func @transform_1(%arg0: i32) -> (i32, i32) {
    %c0_i32 = arith.constant 0 : i32
    %c0_i32_0 = arith.constant 0 : i32
    %c0_i32_1 = arith.constant 0 : i32
    return %c0_i32, %c0_i32_0 : i32, i32
  }
  func.func @transform_2(%arg0: i32) -> (i32, i32) {
    %c0_i32 = arith.constant 0 : i32
    %c0_i32_0 = arith.constant 0 : i32
    %c0_i32_1 = arith.constant 0 : i32
    return %c0_i32, %c0_i32_0 : i32, i32
  }
  func.func @transform_3(%arg0: i32) -> (i32, i32) {
    %c0_i32 = arith.constant 0 : i32
    %c0_i32_0 = arith.constant 0 : i32
    return %arg0, %c0_i32 : i32, i32
  }
}

</mosaic_0001>

<llo_original>
// kernel: tpu_custom_call.1
$region0: #{tpu_custom_call.1}
  #allocation0 [shape = 'u32[]', space=smem, size = 0x4, offset = 0x4, fixed_abs, tag = 'smem constant byte address 0x4 - core index']
  #allocation1 [shape = 'u32[144,128]{1,0:T(1,128)}', space=vmem, size = 0x12000, scoped, tag = 'internal scratch']
  %s0 = inlined_call_operand.vmem [shape: f32[8,128], index: 0, kind: input, shape index: {}]
  %s1 = inlined_call_operand.vmem [shape: f32[128,4], index: 1, kind: input, shape index: {}]
  %s2 = inlined_call_operand.vmem [shape: f32[1,4], index: 2, kind: input, shape index: {}]
  %s3 = inlined_call_operand.hbm [shape: f32[8,32], index: 3, kind: output, shape index: {}]
  %s4 = sld [smem:[#allocation0]]
  $region22: #{tpu_custom_call.1} parent=0
    _
  %s6 = ssub.s32 1, %s4
  %s7 = scalar_select 0, %s6, %s4
  $region1: #{tpu_custom_call.1} parent=0
    #allocation2 [shape = 'u8[4096]{0}', space=vmem, size = 0x1000, scoped, tag = 'output window, operand 0, single buffered']
    #allocation3 [shape = 's32[1]{0}', space=sflag, size = 0x4, scoped, tag = 'scoped memory for tpu_custom_call.1']
    %8 = vsyncpa [#allocation3], 0
    // Predicated region
    $region2: #{tpu_custom_call.1} parent=1 // pred_check
      _
    $region3: #{tpu_custom_call.1} parent=1 // pred_check_branch
      %10 = sbr.rel (0) target = $region5
    $region4: #{tpu_custom_call.1} parent=1 // pred_region
      _
    $region5: #{tpu_custom_call.1} parent=1 // pred_fallthru
      _
    // Predicated region
    $region6: #{tpu_custom_call.1} parent=1 // pred_check
      _
    $region7: #{tpu_custom_call.1} parent=1 // pred_check_branch
      %12 = sbr.rel (0) target = $region9
    $region8: #{tpu_custom_call.1} parent=1 // pred_region
      _
    $region9: #{tpu_custom_call.1} parent=1 // pred_fallthru
      _
    // Predicated region
    $region10: #{tpu_custom_call.1} parent=1 // pred_check
      _
    $region11: #{tpu_custom_call.1} parent=1 // pred_check_branch
      %14 = sbr.rel (0) target = $region13
    $region12: #{tpu_custom_call.1} parent=1 // pred_region
      _
    $region13: #{tpu_custom_call.1} parent=1 // pred_fallthru
      _
    %v15 = vld [vmem:[%s0] sm:$0xff]
    %v16 = vmax.f32 %v15, 0.0
    %v17 = vld [vmem:[%s1] sm:$0xff]
    %v18 = vld [vmem:[%s1 + $0x8] sm:$0xff]
    %v19 = vld [vmem:[%s1 + $0x10] sm:$0xff]
    %v20 = vld [vmem:[%s1 + $0x18] sm:$0xff]
    %v21 = vld [vmem:[%s1 + $0x20] sm:$0xff]
    %v22 = vld [vmem:[%s1 + $0x28] sm:$0xff]
    %v23 = vld [vmem:[%s1 + $0x30] sm:$0xff]
    %v24 = vld [vmem:[%s1 + $0x38] sm:$0xff]
    %v25 = vld [vmem:[%s1 + $0x40] sm:$0xff]
    %v26 = vld [vmem:[%s1 + $0x48] sm:$0xff]
    %v27 = vld [vmem:[%s1 + $0x50] sm:$0xff]
    %v28 = vld [vmem:[%s1 + $0x58] sm:$0xff]
    %v29 = vld [vmem:[%s1 + $0x60] sm:$0xff]
    %v30 = vld [vmem:[%s1 + $0x68] sm:$0xff]
    %v31 = vld [vmem:[%s1 + $0x70] sm:$0xff]
    %v32 = vld [vmem:[%s1 + $0x78] sm:$0xff]
    %v33 = vld [vmem:[%s2] sm:$0x1]
    %v35 = vlaneseq
    %v36 = vshrl.u32 %v35, 7
    %v37 = vsub.s32 0, %v36
    %v38 = vrot.slane %v33, %v37
    %40 = vmatprep.subr.mxu0 0.0
    %41 = vmatpush1.msra.mxu0 %v17
    %42 = vmatprep.subr.mxu0 0.0
    %43 = vmatpush1.msra.mxu0 %v18
    %44 = vmatprep.subr.mxu0 0.0
    %45 = vmatpush1.msra.mxu0 %v19
    %46 = vmatprep.subr.mxu0 0.0
    %47 = vmatpush1.msra.mxu0 %v20
    %48 = vmatprep.subr.mxu0 0.0
    %49 = vmatpush1.msra.mxu0 %v21
    %50 = vmatprep.subr.mxu0 0.0
    %51 = vmatpush1.msra.mxu0 %v22
    %52 = vmatprep.subr.mxu0 0.0
    %53 = vmatpush1.msra.mxu0 %v23
    %54 = vmatprep.subr.mxu0 0.0
    %55 = vmatpush1.msra.mxu0 %v24
    %56 = vmatprep.subr.mxu0 0.0
    %57 = vmatpush1.msra.mxu0 %v25
    %58 = vmatprep.subr.mxu0 0.0
    %59 = vmatpush1.msra.mxu0 %v26
    %60 = vmatprep.subr.mxu0 0.0
    %61 = vmatpush1.msra.mxu0 %v27
    %62 = vmatprep.subr.mxu0 0.0
    %63 = vmatpush1.msra.mxu0 %v28
    %64 = vmatprep.subr.mxu0 0.0
    %65 = vmatpush1.msra.mxu0 %v29
    %66 = vmatprep.subr.mxu0 0.0
    %67 = vmatpush1.msra.mxu0 %v30
    %68 = vmatprep.subr.mxu0 0.0
    %69 = vmatpush1.msra.mxu0 %v31
    %70 = vmatprep.subr.mxu0 0.0
    %71 = vmatpush1.msra.mxu0 %v32
    %72 = vmatprep.subr.mxu0 0.0
    %73 = vmatpush1.msra.mxu0 0.0
    %74 = vmatprep.subr.mxu0 0.0
    %75 = vmatpush1.msra.mxu0 0.0
    %76 = vmatprep.subr.mxu0 0.0
    %77 = vmatpush1.msra.mxu0 0.0
    %78 = vmatprep.subr.mxu0 0.0
    %79 = vmatpush1.msra.mxu0 0.0
    %80 = vmatprep.subr.mxu0 0.0
    %81 = vmatpush1.msra.mxu0 0.0
    %82 = vmatprep.subr.mxu0 0.0
    %83 = vmatpush1.msra.mxu0 0.0
    %84 = vmatprep.subr.mxu0 0.0
    %85 = vmatpush1.msra.mxu0 0.0
    %86 = vmatprep.subr.mxu0 0.0
    %87 = vmatpush1.msra.mxu0 0.0
    %88 = vmatprep.subr.mxu0 0.0
    %89 = vmatpush1.msra.mxu0 0.0
    %90 = vmatprep.subr.mxu0 0.0
    %91 = vmatpush1.msra.mxu0 0.0
    %92 = vmatprep.subr.mxu0 0.0
    %93 = vmatpush1.msra.mxu0 0.0
    %94 = vmatprep.subr.mxu0 0.0
    %95 = vmatpush1.msra.mxu0 0.0
    %96 = vmatprep.subr.mxu0 0.0
    %97 = vmatpush1.msra.mxu0 0.0
    %98 = vmatprep.subr.mxu0 0.0
    %99 = vmatpush1.msra.mxu0 0.0
    %100 = vmatprep.subr.mxu0 0.0
    %101 = vmatpush1.msra.mxu0 0.0
    %102 = vmatprep.subr.mxu0 0.0
    %103 = vmatpush1.msra.mxu0 0.0
    %104 = vmatprep.mubr.f32.mxu0 0.0
    %105 = vmatmul.mubr.f32.gmra.mrb[0].mxu0 %v16
    %v106 = vpop.f32.mrb[0].mxu0
    %v107 = vadd.f32 %v38, %v106
    %v108 = vpop.f32.mrb[0].mxu0
    %109 = vdwg.mxu0
    %vm110 = vcmask 31744
    %v111 = vsel %vm110, %v107, -inf
    %112 = vmax.xlane.f32.xlu0 %v111
    %v113 = vpop.xlane.xlu0 %112
    %v114 = vsub.f32 %v107, %v113
    %v115 = vmul.f32 %v114, 1.442695
    %v116 = vpow.pop %v115
    %v117 = vsel %vm110, %v116, 0.0
    %118 = vadd.xlane.f32.xlu0 %v117
    %v119 = vpop.xlane.xlu0 %118
    %v120 = vrcp.pop %v119
    %v121 = vmul.f32 %v116, %v120
    %123 = vset.pattern.permute.xlu0 0
    %124 = vperm.xlu0 %123, %v121
    %v125 = vpop.permute.xlu0 %124
    %v127 = vmul.f32 %v125, %v15
    %128 = vset.pattern.permute.xlu0 1
    %129 = vperm.xlu0 %128, %v121
    %v130 = vpop.permute.xlu0 %129
    %v132 = vmul.f32 %v130, %v15
    %134 = vrot.lane.b32.xlu0 %v132, 96
    %v135 = vpop.permute.xlu0 %134
    %v137 = vadd.f32 %v127, %v135
    %138 = vset.pattern.permute.xlu0 2
    %139 = vperm.xlu0 %138, %v121
    %v140 = vpop.permute.xlu0 %139
    %v142 = vmul.f32 %v140, %v15
    %144 = vrot.lane.b32.xlu0 %v142, 64
    %v145 = vpop.permute.xlu0 %144
    %v147 = vadd.f32 %v137, %v145
    %148 = vset.pattern.permute.xlu0 3
    %149 = vperm.xlu0 %148, %v121
    %v150 = vpop.permute.xlu0 %149
    %v152 = vmul.f32 %v150, %v15
    %154 = vrot.lane.b32.xlu0 %v152, 32
    %v155 = vpop.permute.xlu0 %154
    %v157 = vadd.f32 %v147, %v155
    %vm158 = vcmask 261120
    %159 = vst.msk [vmem:[#allocation2] sm:$0xff] %vm158, %v157
    // Predicated region
    $region14: #{tpu_custom_call.1} parent=1 // pred_check
      _
    $region15: #{tpu_custom_call.1} parent=1 // pred_check_branch
      %161 = sbr.rel (0) target = $region17
    $region16: #{tpu_custom_call.1} parent=1 // pred_region
      %s163 = ssub.s32 128, 128
      %164 = vsyncadd [#allocation3], %s163
      %s166 = sshll.u32 [#allocation2], 4
      %s167 = int_to_ptr.vmem [resolvable:$true] %s166
      %169 = dma.vmem_to_hbm [thread:$0]  %s167, 128, %s3, [#allocation3]
    $region17: #{tpu_custom_call.1} parent=1 // pred_fallthru
      _
    // Predicated region
    $region18: #{tpu_custom_call.1} parent=1 // pred_check
      _
    $region19: #{tpu_custom_call.1} parent=1 // pred_check_branch
      %171 = sbr.rel (0) target = $region21
    $region20: #{tpu_custom_call.1} parent=1 // pred_region
      %172 = dma.done [#allocation3], 128
    $region21: #{tpu_custom_call.1} parent=1 // pred_fallthru
      _
    %173 = vsyncpa [#allocation3], 1

</llo_original>
